<compile_context>
chip_gen: v6e
topology: v6e:2x2x1
jax: 0.10.0
libtpu: 0.0.40
codegen_flags: <defaults>
</compile_context>

<pallas_src>
import functools

import jax
import jax.numpy as jnp
from jax.experimental import pallas as pl
from jax.experimental.pallas import tpu as pltpu


def _skip_mlp_kernel(xc_ref, xo_ref, wc_ref, wcoord_ref, b_ref, out_ref, *,
                     n_layers, c_ctx, mm_dtype):
    # xc_ref     : (C_ctx,   TN)       context / previous-activation tile (mm_dtype)
    # xo_ref     : (C_coord, TN)       coord tile (mm_dtype)
    # wc_ref     : (L, C_ctx, C_ctx)   wc_ref[l] = W_top[l].T             (mm_dtype)
    # wcoord_ref : (L*C_ctx, C_coord)  rows [l*C:(l+1)*C] = W_bot[l].T    (mm_dtype)
    # b_ref      : (L*C_ctx, 1)        biases, f32
    # out_ref    : (C_ctx,   TN)       output tile (out dtype)
    coord = xo_ref[...]

    # Hoist coord contribution + bias for ALL layers into a single MXU push:
    #   coord_all[l*C:(l+1)*C, :] = W_bot[l].T @ coord + b[l][:, None]
    coord_all = (
        jnp.dot(wcoord_ref[...], coord, preferred_element_type=jnp.float32)
        + b_ref[...]
    )

    y_mm = xc_ref[...]            # matmul operand for the first layer
    y_f32 = None
    for l in range(n_layers):     # short chain, fully unrolled
        z = (
            jnp.dot(wc_ref[l], y_mm, preferred_element_type=jnp.float32)
            + coord_all[l * c_ctx:(l + 1) * c_ctx, :]
        )
        # NOTE: the reference's residual add (`y + y_res`) is unreachable — skipped.
        y_f32 = jnp.maximum(z, 0.0)           # ReLU in f32
        y_mm = y_f32.astype(mm_dtype)         # operand for the next layer (no-op if f32)

    out_ref[...] = y_f32.astype(out_ref.dtype)


def _round_up(x, m):
    return ((x + m - 1) // m) * m


def skip_mlp_block(x_context, x_coord, w_stack, b_stack, *,
                   tile_n=1024, matmul_dtype=None):
    """Fused SkipMLPBlock forward.

    x_context: (N, C_ctx) f32
    x_coord:   (N, C_coord) f32
    w_stack:   (L, C_ctx + C_coord, C_ctx) f32, (in_features, out_features) layout
    b_stack:   (L, C_ctx) f32
    matmul_dtype: dtype of the MXU operands (None -> x_context.dtype).
        Use jnp.bfloat16 on v6e/v7x; keep f32 on v5e.
    returns (y, x_coord), y of shape (N, C_ctx) in x_context.dtype
    """
    N, c_ctx = x_context.shape
    _, c_coord = x_coord.shape
    n_layers = w_stack.shape[0]
    assert n_layers >= 1
    assert w_stack.shape == (n_layers, c_ctx + c_coord, c_ctx)
    assert b_stack.shape == (n_layers, c_ctx)

    out_dtype = x_context.dtype
    mm_dtype = out_dtype if matmul_dtype is None else jnp.dtype(matmul_dtype)

    # ---- layout plumbing: done ONCE in the wrapper, not per grid step -------
    # Lane-dense (feature, batch) layout; batch padded to a tile_n multiple.
    tile_n = _round_up(max(int(tile_n), 128), 128)
    tile_n = min(tile_n, _round_up(N, 128))
    n_pad = _round_up(N, tile_n)

    def to_lane_dense(x):
        xt = x.T.astype(mm_dtype)                      # (C, N)
        if n_pad != N:
            xt = jnp.pad(xt, ((0, 0), (0, n_pad - N)))
        return xt

    xc_t = to_lane_dense(x_context)                    # (C_ctx,   n_pad)
    xo_t = to_lane_dense(x_coord)                      # (C_coord, n_pad)

    # Split + transpose each Linear weight:
    #   (cat([y, coord]) @ W).T == W_top.T @ y.T + W_bot.T @ coord.T
    w_ctx_t = jnp.transpose(w_stack[:, :c_ctx, :], (0, 2, 1)).astype(mm_dtype)  # (L, C, C)
    w_coord_flat = (
        jnp.transpose(w_stack[:, c_ctx:, :], (0, 2, 1))                         # (L, C, C_coord)
        .reshape(n_layers * c_ctx, c_coord)
        .astype(mm_dtype)
    )
    b_flat = b_stack.reshape(n_layers * c_ctx, 1).astype(jnp.float32)

    grid = (n_pad // tile_n,)
    kernel = functools.partial(
        _skip_mlp_kernel, n_layers=n_layers, c_ctx=c_ctx, mm_dtype=mm_dtype)

    y_t = pl.pallas_call(
        kernel,
        out_shape=jax.ShapeDtypeStruct((c_ctx, n_pad), out_dtype),
        grid_spec=pltpu.PrefetchScalarGridSpec(
            num_scalar_prefetch=0,
            grid=grid,
            in_specs=[
                pl.BlockSpec((c_ctx, tile_n), lambda i: (0, i)),
                pl.BlockSpec((c_coord, tile_n), lambda i: (0, i)),
                # Weights / bias: constant block index -> resident, not re-fetched.
                pl.BlockSpec((n_layers, c_ctx, c_ctx), lambda i: (0, 0, 0)),
                pl.BlockSpec((n_layers * c_ctx, c_coord), lambda i: (0, 0)),
                pl.BlockSpec((n_layers * c_ctx, 1), lambda i: (0, 0)),
            ],
            out_specs=pl.BlockSpec((c_ctx, tile_n), lambda i: (0, i)),
        ),
        compiler_params=pltpu.CompilerParams(
            dimension_semantics=("parallel",),
        ),
    )(xc_t, xo_t, w_ctx_t, w_coord_flat, b_flat)

    y = y_t[:, :N].T                                   # back to (N, C_ctx), drop padding
    return y, x_coord


def _reference(x_context, x_coord, w_stack, b_stack):
    """Pure-JAX replica of the PyTorch forward for validation."""
    n_layers = w_stack.shape[0]
    x = jnp.concatenate([x_context, x_coord], axis=1)
    y = x @ w_stack[0] + b_stack[0]
    # y_res = y  # dead code in reference (condition never true)
    y = jax.nn.relu(y)
    for i in range(1, n_layers):
        x_i = jnp.concatenate([y, x_coord], axis=1)
        y = x_i @ w_stack[i] + b_stack[i]
        y = jax.nn.relu(y)
    return y, x_coord


if __name__ == "__main__":
    # Small, deterministic setup.  N is deliberately NOT a multiple of 128 to
    # exercise the padding path; C matches a typical SkipMLPBlock config.
    N = 1000           # batch of coordinate samples
    C_CTX = 32         # n_context_features
    C_COORD = 8        # n_coord_features
    L = 3              # n_dense_layers

    key = jax.random.PRNGKey(0)
    k_ctx, k_coord, k_w, k_b = jax.random.split(key, 4)

    x_context = jax.random.normal(k_ctx, (N, C_CTX), dtype=jnp.float32)
    x_coord = jax.random.normal(k_coord, (N, C_COORD), dtype=jnp.float32)

    # nn.Linear(in=C_CTX+C_COORD, out=C_CTX) per layer; weights stored as
    # (in_features, out_features) so that y = x @ W + b.
    fan_in = C_CTX + C_COORD
    bound = 1.0 / jnp.sqrt(fan_in)
    w_stack = jax.random.uniform(
        k_w, (L, fan_in, C_CTX), minval=-bound, maxval=bound, dtype=jnp.float32
    )
    b_stack = jax.random.uniform(
        k_b, (L, C_CTX), minval=-bound, maxval=bound, dtype=jnp.float32
    )

    y_ref, _ = _reference(x_context, x_coord, w_stack, b_stack)

    # f32 path (all generations).  Small tile here so the demo also exercises a
    # multi-step grid (weight reuse + pipelining); real workloads use 1024-4096.
    y, coord_out = skip_mlp_block(x_context, x_coord, w_stack, b_stack, tile_n=256)
    jax.block_until_ready(y)
    jax.block_until_ready(coord_out)
    assert jnp.allclose(y, y_ref, atol=1e-4, rtol=1e-4), "f32 mismatch vs reference"
    assert jnp.array_equal(coord_out, x_coord)

    # bf16 MXU operands on v6e / v7x (accumulate + ReLU stay f32 in-kernel);
    # skipped on v5e, whose VPU has no bf16 support.
    device_kind = jax.devices()[0].device_kind.lower()
    if ("v6" in device_kind) or ("v7" in device_kind):
        y16, _ = skip_mlp_block(
            x_context, x_coord, w_stack, b_stack, matmul_dtype=jnp.bfloat16
        )
        jax.block_until_ready(y16)
        assert jnp.allclose(y16, y_ref, atol=5e-2, rtol=5e-2), "bf16 mismatch vs reference"

    print("KERNEL_OK")
</pallas_src>

<mosaic_0001>
module attributes {stable_mosaic.version = 11 : i64} {
  func.func @_skip_mlp_kernel(%arg0: i32, %arg1: memref<32x256xf32, #tpu.memory_space<vmem>>, %arg2: memref<8x256xf32, #tpu.memory_space<vmem>>, %arg3: memref<3x32x32xf32, #tpu.memory_space<vmem>>, %arg4: memref<96x8xf32, #tpu.memory_space<vmem>>, %arg5: memref<96x1xf32, #tpu.memory_space<vmem>>, %arg6: memref<32x256xf32, #tpu.memory_space<vmem>>) attributes {dimension_semantics = [#tpu.dimension_semantics<parallel>], iteration_bounds = array<i64: 4>, scalar_prefetch = 0 : i64, scratch_operands = 0 : i64, tpu.core_type = #tpu.core_type<tc>, window_params = [{transform_indices = @transform_0, window_bounds = array<i64: 32, 256>}, {transform_indices = @transform_1, window_bounds = array<i64: 8, 256>}, {pipeline_mode = #tpu.pipeline_mode<synchronous>, transform_indices = @transform_2, window_bounds = array<i64: 3, 32, 32>}, {pipeline_mode = #tpu.pipeline_mode<synchronous>, transform_indices = @transform_3, window_bounds = array<i64: 96, 8>}, {pipeline_mode = #tpu.pipeline_mode<synchronous>, transform_indices = @transform_4, window_bounds = array<i64: 96, 1>}, {transform_indices = @transform_5, window_bounds = array<i64: 32, 256>}]} {
    %c0 = arith.constant 0 : index
    %c0_0 = arith.constant 0 : index
    %0 = vector.load %arg2[%c0, %c0_0] : memref<8x256xf32, #tpu.memory_space<vmem>>, vector<8x256xf32>
    %c0_1 = arith.constant 0 : index
    %c0_2 = arith.constant 0 : index
    %1 = vector.load %arg4[%c0_1, %c0_2] : memref<96x8xf32, #tpu.memory_space<vmem>>, vector<96x8xf32>
    %cst = arith.constant dense<0.000000e+00> : vector<96x256xf32>
    %2 = tpu.matmul %1, %0, %cst {dimension_numbers = #tpu.dot_dimension_numbers<[1], [0], [0], [1], [0, 0, 1, 1], [], []>} : vector<96x8xf32>, vector<8x256xf32>, vector<96x256xf32> -> vector<96x256xf32>
    %c0_3 = arith.constant 0 : index
    %c0_4 = arith.constant 0 : index
    %3 = vector.load %arg5[%c0_3, %c0_4] : memref<96x1xf32, #tpu.memory_space<vmem>>, vector<96x1xf32>
    %4 = vector.broadcast %3 : vector<96x1xf32> to vector<96x256xf32>
    %5 = arith.addf %2, %4 : vector<96x256xf32>
    %c0_5 = arith.constant 0 : index
    %c0_6 = arith.constant 0 : index
    %6 = vector.load %arg1[%c0_5, %c0_6] : memref<32x256xf32, #tpu.memory_space<vmem>>, vector<32x256xf32>
    %c0_7 = arith.constant 0 : index
    %c0_8 = arith.constant 0 : index
    %c0_9 = arith.constant 0 : index
    %7 = vector.load %arg3[%c0_7, %c0_8, %c0_9] : memref<3x32x32xf32, #tpu.memory_space<vmem>>, vector<1x32x32xf32>
    %8 = vector.shape_cast %7 : vector<1x32x32xf32> to vector<32x32xf32>
    %cst_10 = arith.constant dense<0.000000e+00> : vector<32x256xf32>
    %9 = tpu.matmul %8, %6, %cst_10 {dimension_numbers = #tpu.dot_dimension_numbers<[1], [0], [0], [1], [0, 0, 1, 1], [], []>} : vector<32x32xf32>, vector<32x256xf32>, vector<32x256xf32> -> vector<32x256xf32>
    %10 = vector.extract_strided_slice %5 {offsets = [0, 0], sizes = [32, 256], strides = [1, 1]} : vector<96x256xf32> to vector<32x256xf32>
    %11 = arith.addf %9, %10 : vector<32x256xf32>
    %cst_11 = arith.constant 0.000000e+00 : f32
    %12 = vector.broadcast %cst_11 : f32 to vector<32x256xf32>
    %13 = arith.maximumf %11, %12 : vector<32x256xf32>
    %c1 = arith.constant 1 : index
    %c0_12 = arith.constant 0 : index
    %c0_13 = arith.constant 0 : index
    %14 = vector.load %arg3[%c1, %c0_12, %c0_13] : memref<3x32x32xf32, #tpu.memory_space<vmem>>, vector<1x32x32xf32>
    %15 = vector.shape_cast %14 : vector<1x32x32xf32> to vector<32x32xf32>
    %cst_14 = arith.constant dense<0.000000e+00> : vector<32x256xf32>
    %16 = tpu.matmul %15, %13, %cst_14 {dimension_numbers = #tpu.dot_dimension_numbers<[1], [0], [0], [1], [0, 0, 1, 1], [], []>} : vector<32x32xf32>, vector<32x256xf32>, vector<32x256xf32> -> vector<32x256xf32>
    %17 = vector.extract_strided_slice %5 {offsets = [32, 0], sizes = [32, 256], strides = [1, 1]} : vector<96x256xf32> to vector<32x256xf32>
    %18 = arith.addf %16, %17 : vector<32x256xf32>
    %cst_15 = arith.constant 0.000000e+00 : f32
    %19 = vector.broadcast %cst_15 : f32 to vector<32x256xf32>
    %20 = arith.maximumf %18, %19 : vector<32x256xf32>
    %c2 = arith.constant 2 : index
    %c0_16 = arith.constant 0 : index
    %c0_17 = arith.constant 0 : index
    %21 = vector.load %arg3[%c2, %c0_16, %c0_17] : memref<3x32x32xf32, #tpu.memory_space<vmem>>, vector<1x32x32xf32>
    %22 = vector.shape_cast %21 : vector<1x32x32xf32> to vector<32x32xf32>
    %cst_18 = arith.constant dense<0.000000e+00> : vector<32x256xf32>
    %23 = tpu.matmul %22, %20, %cst_18 {dimension_numbers = #tpu.dot_dimension_numbers<[1], [0], [0], [1], [0, 0, 1, 1], [], []>} : vector<32x32xf32>, vector<32x256xf32>, vector<32x256xf32> -> vector<32x256xf32>
    %24 = vector.extract_strided_slice %5 {offsets = [64, 0], sizes = [32, 256], strides = [1, 1]} : vector<96x256xf32> to vector<32x256xf32>
    %25 = arith.addf %23, %24 : vector<32x256xf32>
    %cst_19 = arith.constant 0.000000e+00 : f32
    %26 = vector.broadcast %cst_19 : f32 to vector<32x256xf32>
    %27 = arith.maximumf %25, %26 : vector<32x256xf32>
    %c0_20 = arith.constant 0 : index
    %c0_21 = arith.constant 0 : index
    %28 = vector.load %arg6[%c0_20, %c0_21] : memref<32x256xf32, #tpu.memory_space<vmem>>, vector<32x256xf32>
    tpu.vector_store %arg6[%c0_20, %c0_21], %27 {strides = array<i32>} : memref<32x256xf32, #tpu.memory_space<vmem>>, vector<32x256xf32>,
    return
  }
  func.func @transform_0(%arg0: i32) -> (i32, i32) {
    %c0_i32 = arith.constant 0 : i32
    %c0_i32_0 = arith.constant 0 : i32
    return %c0_i32, %arg0 : i32, i32
  }
  func.func @transform_1(%arg0: i32) -> (i32, i32) {
    %c0_i32 = arith.constant 0 : i32
    %c0_i32_0 = arith.constant 0 : i32
    return %c0_i32, %arg0 : i32, i32
  }
  func.func @transform_2(%arg0: i32) -> (i32, i32, i32) {
    %c0_i32 = arith.constant 0 : i32
    %c0_i32_0 = arith.constant 0 : i32
    %c0_i32_1 = arith.constant 0 : i32
    %c0_i32_2 = arith.constant 0 : i32
    return %c0_i32, %c0_i32_0, %c0_i32_1 : i32, i32, i32
  }
  func.func @transform_3(%arg0: i32) -> (i32, i32) {
    %c0_i32 = arith.constant 0 : i32
    %c0_i32_0 = arith.constant 0 : i32
    %c0_i32_1 = arith.constant 0 : i32
    return %c0_i32, %c0_i32_0 : i32, i32
  }
  func.func @transform_4(%arg0: i32) -> (i32, i32) {
    %c0_i32 = arith.constant 0 : i32
    %c0_i32_0 = arith.constant 0 : i32
    %c0_i32_1 = arith.constant 0 : i32
    return %c0_i32, %c0_i32_0 : i32, i32
  }
  func.func @transform_5(%arg0: i32) -> (i32, i32) {
    %c0_i32 = arith.constant 0 : i32
    %c0_i32_0 = arith.constant 0 : i32
    return %c0_i32, %arg0 : i32, i32
  }
}

</mosaic_0001>

<llo_original>
// kernel: tpu_custom_call.1
$region0: #{tpu_custom_call.1}
  #allocation0 [shape = 'u32[]', space=smem, size = 0x4, offset = 0x4, fixed_abs, tag = 'smem constant byte address 0x4 - core index']
  #allocation1 [shape = 'u32[144,128]{1,0:T(1,128)}', space=vmem, size = 0x12000, scoped, tag = 'internal scratch']
  %s0 = inlined_call_operand.hbm [shape: f32[32,1024], index: 0, kind: input, shape index: {}]
  %s1 = inlined_call_operand.vmem [shape: f32[8,1024], index: 1, kind: input, shape index: {}]
  %s2 = inlined_call_operand.vmem [shape: f32[3,32,32], index: 2, kind: input, shape index: {}]
  %s3 = inlined_call_operand.vmem [shape: f32[96,8], index: 3, kind: input, shape index: {}]
  %s4 = inlined_call_operand.vmem [shape: f32[96,1], index: 4, kind: input, shape index: {}]
  %s5 = inlined_call_operand.hbm [shape: f32[32,1024], index: 5, kind: output, shape index: {}]
  %s6 = sld [smem:[#allocation0]]
  $region57: #{tpu_custom_call.1} parent=0
    _
  %s8 = ssub.s32 1, %s6
  %s9 = scalar_select 0, %s8, %s6
  $region1: #{tpu_custom_call.1} parent=0
    #allocation2 [shape = 'u8[65536]{0}', space=vmem, size = 0x10000, scoped, tag = 'input window, operand 0']
    #allocation3 [shape = 's32[2]{0}', space=sflag, size = 0x8, scoped, tag = 'scoped memory for tpu_custom_call.1']
    #allocation4 [shape = 's32[2]{0}', space=sflag, size = 0x8, scoped, tag = 'scoped memory for tpu_custom_call.1']
    #allocation5 [shape = 'u8[65536]{0}', space=vmem, size = 0x10000, scoped, tag = 'output window, operand 0']
    %10 = vsyncpa [#allocation3], 0
    %s11 = scalar_lea.sflag [#allocation3], 1
    %12 = vsyncpa %s11, 0
    %13 = vsyncpa [#allocation4], 0
    %s14 = scalar_lea.sflag [#allocation4], 1
    %15 = vsyncpa %s14, 0
    loop: start=0, step=1, limit=6
    $region2: #{tpu_custom_call.1} parent=1 // loop_pre_header
      _
    $region3: #{tpu_custom_call.1} parent=1 // loop_header
      %s17 = sphi 0, %s21
      %p18 = scmp.ge.s32.totalorder %s17, 6
      %s27 = sphi 0, %s29
      %s30 = sphi 0, %s27
      %s31 = sphi 0, %s30
      %s47 = sphi 0, %s31
      %s53 = sphi 0, %s55
      %s56 = sphi 0, %s53
      %s57 = sphi 0, %s56
      %s73 = sphi 0, %s57
      %s77 = sphi 0, %s77
      %s79 = sphi 0, %s77
      %s80 = sphi 0, %s79
      %s94 = sphi 0, %s80
      %s98 = sphi 0, %s98
      %s100 = sphi 0, %s98
      %s101 = sphi 0, %s100
      %s115 = sphi 0, %s101
      %s119 = sphi 0, %s119
      %s121 = sphi 0, %s119
      %s122 = sphi 0, %s121
      %s136 = sphi 0, %s122
      %s142 = sphi 0, %s144
      %s145 = sphi 0, %s142
      %s146 = sphi 0, %s145
      %s162 = sphi 0, %s146
    $region4: #{tpu_custom_call.1} parent=1 // loop_header_branch
      %20 = sbr.rel (%p18) target = $region8
    $region5: #{tpu_custom_call.1} parent=1 // loop_body
      %s22 = ssub.s32 %s17, 1
      %s23 = ssub.s32 %s17, 2
      %s24 = sadd.s32 %s17, 1
      %s25 = ssub.s32 %s17, %s24
      %p26 = scmp.eq.s32.totalorder %s25, 0
      %s28 = sadd.s32 %s27, 1
      %s29 = scalar_select %p26, %s27, %s28
      %p32 = pneg %p26
      %p33 = scmp.eq.s32.totalorder %s17, 3
      %p34 = por %p32, %p33
      %p35 = scmp.ne.s32.totalorder %s27, %s30
      %p36 = scmp.eq.s32.totalorder %s17, 0
      %p37 = por %p35, %p36
      %p38 = scmp.ne.s32.totalorder %s27, %s30
      %p39 = scmp.eq.s32.totalorder %s22, 3
      %p40 = por %p38, %p39
      %p41 = scmp.ne.s32.totalorder %s30, %s31
      %p42 = scmp.eq.s32.totalorder %s22, 0
      %p43 = por %p41, %p42
      %p44 = scmp.ne.s32.totalorder %s30, %s31
      %p45 = scmp.eq.s32.totalorder %s23, 3
      %p46 = por %p44, %p45
      %p48 = scmp.ne.s32.totalorder %s31, %s47
      %p49 = scmp.eq.s32.totalorder %s23, 0
      %p50 = por %p48, %p49
      %s51 = ssub.s32 %s17, %s24
      %p52 = scmp.eq.s32.totalorder %s51, 0
      %s54 = sadd.s32 %s53, 1
      %s55 = scalar_select %p52, %s53, %s54
      %p58 = pneg %p52
      %p59 = scmp.eq.s32.totalorder %s17, 3
      %p60 = por %p58, %p59
      %p61 = scmp.ne.s32.totalorder %s53, %s56
      %p62 = scmp.eq.s32.totalorder %s17, 0
      %p63 = por %p61, %p62
      %p64 = scmp.ne.s32.totalorder %s53, %s56
      %p65 = scmp.eq.s32.totalorder %s22, 3
      %p66 = por %p64, %p65
      %p67 = scmp.ne.s32.totalorder %s56, %s57
      %p68 = scmp.eq.s32.totalorder %s22, 0
      %p69 = por %p67, %p68
      %p70 = scmp.ne.s32.totalorder %s56, %s57
      %p71 = scmp.eq.s32.totalorder %s23, 3
      %p72 = por %p70, %p71
      %p74 = scmp.ne.s32.totalorder %s57, %s73
      %p75 = scmp.eq.s32.totalorder %s23, 0
      %p76 = por %p74, %p75
      %s78 = sadd.s32 %s77, 1
      %p81 = scmp.eq.s32.totalorder %s17, 3
      %p82 = scmp.ne.s32.totalorder %s77, %s79
      %p83 = scmp.eq.s32.totalorder %s17, 0
      %p84 = por %p82, %p83
      %p85 = scmp.ne.s32.totalorder %s77, %s79
      %p86 = scmp.eq.s32.totalorder %s22, 3
      %p87 = por %p85, %p86
      %p88 = scmp.ne.s32.totalorder %s79, %s80
      %p89 = scmp.eq.s32.totalorder %s22, 0
      %p90 = por %p88, %p89
      %p91 = scmp.ne.s32.totalorder %s79, %s80
      %p92 = scmp.eq.s32.totalorder %s23, 3
      %p93 = por %p91, %p92
      %p95 = scmp.ne.s32.totalorder %s80, %s94
      %p96 = scmp.eq.s32.totalorder %s23, 0
      %p97 = por %p95, %p96
      %s99 = sadd.s32 %s98, 1
      %p102 = scmp.eq.s32.totalorder %s17, 3
      %p103 = scmp.ne.s32.totalorder %s98, %s100
      %p104 = scmp.eq.s32.totalorder %s17, 0
      %p105 = por %p103, %p104
      %p106 = scmp.ne.s32.totalorder %s98, %s100
      %p107 = scmp.eq.s32.totalorder %s22, 3
      %p108 = por %p106, %p107
      %p109 = scmp.ne.s32.totalorder %s100, %s101
      %p110 = scmp.eq.s32.totalorder %s22, 0
      %p111 = por %p109, %p110
      %p112 = scmp.ne.s32.totalorder %s100, %s101
      %p113 = scmp.eq.s32.totalorder %s23, 3
      %p114 = por %p112, %p113
      %p116 = scmp.ne.s32.totalorder %s101, %s115
      %p117 = scmp.eq.s32.totalorder %s23, 0
      %p118 = por %p116, %p117
      %s120 = sadd.s32 %s119, 1
      %p123 = scmp.eq.s32.totalorder %s17, 3
      %p124 = scmp.ne.s32.totalorder %s119, %s121
      %p125 = scmp.eq.s32.totalorder %s17, 0
      %p126 = por %p124, %p125
      %p127 = scmp.ne.s32.totalorder %s119, %s121
      %p128 = scmp.eq.s32.totalorder %s22, 3
      %p129 = por %p127, %p128
      %p130 = scmp.ne.s32.totalorder %s121, %s122
      %p131 = scmp.eq.s32.totalorder %s22, 0
      %p132 = por %p130, %p131
      %p133 = scmp.ne.s32.totalorder %s121, %s122
      %p134 = scmp.eq.s32.totalorder %s23, 3
      %p135 = por %p133, %p134
      %p137 = scmp.ne.s32.totalorder %s122, %s136
      %p138 = scmp.eq.s32.totalorder %s23, 0
      %p139 = por %p137, %p138
      %s140 = ssub.s32 %s17, %s24
      %p141 = scmp.eq.s32.totalorder %s140, 0
      %s143 = sadd.s32 %s142, 1
      %s144 = scalar_select %p141, %s142, %s143
      %p147 = pneg %p141
      %p148 = scmp.eq.s32.totalorder %s17, 3
      %p149 = por %p147, %p148
      %p150 = scmp.ne.s32.totalorder %s142, %s145
      %p151 = scmp.eq.s32.totalorder %s17, 0
      %p152 = por %p150, %p151
      %p153 = scmp.ne.s32.totalorder %s142, %s145
      %p154 = scmp.eq.s32.totalorder %s22, 3
      %p155 = por %p153, %p154
      %p156 = scmp.ne.s32.totalorder %s145, %s146
      %p157 = scmp.eq.s32.totalorder %s22, 0
      %p158 = por %p156, %p157
      %p159 = scmp.ne.s32.totalorder %s145, %s146
      %p160 = scmp.eq.s32.totalorder %s23, 3
      %p161 = por %p159, %p160
      %p163 = scmp.ne.s32.totalorder %s146, %s162
      %p164 = scmp.eq.s32.totalorder %s23, 0
      %p165 = por %p163, %p164
      %p166 = scmp.le.s32.totalorder 1, %s17
      %p167 = scmp.lt.s32.totalorder %s17, 5
      %p168 = pnand %p166, %p167
      %p169 = pneg %p168
      // Predicated region
      $region9: #{tpu_custom_call.1} parent=5 // pred_check
        _
      $region10: #{tpu_custom_call.1} parent=5 // pred_check_branch
        %171 = sbr.rel (%p168) target = $region12
      $region11: #{tpu_custom_call.1} parent=5 // pred_region
        %s172 = ssub.s32 %s17, 1
        // Predicated region
        $region13: #{tpu_custom_call.1} parent=11 // pred_check
          %p173 = pneg %p90
        $region14: #{tpu_custom_call.1} parent=11 // pred_check_branch
          %175 = sbr.rel (%p173) target = $region16
        $region15: #{tpu_custom_call.1} parent=11 // pred_region
          _
        $region16: #{tpu_custom_call.1} parent=11 // pred_fallthru
          _
        // Predicated region
        $region17: #{tpu_custom_call.1} parent=11 // pred_check
          %p176 = pneg %p111
        $region18: #{tpu_custom_call.1} parent=11 // pred_check_branch
          %178 = sbr.rel (%p176) target = $region20
        $region19: #{tpu_custom_call.1} parent=11 // pred_region
          _
        $region20: #{tpu_custom_call.1} parent=11 // pred_fallthru
          _
        // Predicated region
        $region21: #{tpu_custom_call.1} parent=11 // pred_check
          %p179 = pneg %p132
        $region22: #{tpu_custom_call.1} parent=11 // pred_check_branch
          %181 = sbr.rel (%p179) target = $region24
        $region23: #{tpu_custom_call.1} parent=11 // pred_region
          _
        $region24: #{tpu_custom_call.1} parent=11 // pred_fallthru
          _
      $region12: #{tpu_custom_call.1} parent=5 // pred_fallthru
        _
      %p182 = scmp.lt.s32.totalorder %s17, 4
      // Predicated region
      $region25: #{tpu_custom_call.1} parent=5 // pred_check
        %p183 = pneg %p182
      $region26: #{tpu_custom_call.1} parent=5 // pred_check_branch
        %185 = sbr.rel (%p183) target = $region28
      $region27: #{tpu_custom_call.1} parent=5 // pred_region
        // Predicated region
        $region29: #{tpu_custom_call.1} parent=27 // pred_check
          %p186 = pneg %p37
        $region30: #{tpu_custom_call.1} parent=27 // pred_check_branch
          %188 = sbr.rel (%p186) target = $region32
        $region31: #{tpu_custom_call.1} parent=27 // pred_region
          %s189 = sand.u32 %s27, 1
          %s190 = scalar_lea.sflag [#allocation3], %s189
          %s191 = sand.u32 %s27, 1
          %s192 = smul.addr %s191, 64
          %s193 = scalar_lea.vmem [#allocation2], %s192
          %s194 = smul.u32 2, %s17
          %s196 = ssub.s32 1024, 1024
          %197 = vsyncadd %s190, %s196
          %s198 = smul.addr %s194, 128
          %s199 = scalar_lea.hbm %s0, %s198
          %s200 = sshll.u32 %s193, 4
          %s201 = int_to_ptr.vmem [resolvable:$true] %s200
          %206 = dma.hbm_to_vmem [thread:$0]  %s199, 1024, %s201, %s190, 1024, 256, 16
        $region32: #{tpu_custom_call.1} parent=27 // pred_fallthru
          _
        // Predicated region
        $region33: #{tpu_custom_call.1} parent=27 // pred_check
          %p207 = pneg %p63
        $region34: #{tpu_custom_call.1} parent=27 // pred_check_branch
          %209 = sbr.rel (%p207) target = $region36
        $region35: #{tpu_custom_call.1} parent=27 // pred_region
          %s210 = smul.u32 2, %s17
          %p211 = scmp.lt.s32.totalorder %s210, 7
          %s212 = scalar_select %p211, %s210, 7
          %s213 = smul.addr %s212, 8
          %s214 = scalar_lea.vmem %s1, %s213
          %s215 = smul.u32 2, %s17
        $region36: #{tpu_custom_call.1} parent=27 // pred_fallthru
          _
      $region28: #{tpu_custom_call.1} parent=5 // pred_fallthru
        _
      %p216 = scmp.le.s32.totalorder 1, %s17
      %p217 = scmp.lt.s32.totalorder %s17, 5
      %p218 = pnand %p216, %p217
      %p219 = pneg %p218
      // Predicated region
      $region37: #{tpu_custom_call.1} parent=5 // pred_check
        _
      $region38: #{tpu_custom_call.1} parent=5 // pred_check_branch
        %221 = sbr.rel (%p218) target = $region40
      $region39: #{tpu_custom_call.1} parent=5 // pred_region
        %s222 = ssub.s32 %s17, 1
        %s223 = sand.u32 %s30, 1
        %s224 = scalar_lea.sflag [#allocation3], %s223
        %s225 = sand.u32 %s30, 1
        %s226 = smul.addr %s225, 64
        %s227 = scalar_lea.vmem [#allocation2], %s226
        // Predicated region
        $region41: #{tpu_custom_call.1} parent=39 // pred_check
          %p228 = pneg %p43
        $region42: #{tpu_custom_call.1} parent=39 // pred_check_branch
          %230 = sbr.rel (%p228) target = $region44
        $region43: #{tpu_custom_call.1} parent=39 // pred_region
          %231 = dma.done %s224, 1024
        $region44: #{tpu_custom_call.1} parent=39 // pred_fallthru
          _
        %s232 = sand.u32 %s30, 1
        %s233 = scalar_lea.sflag [#allocation3], %s232
        %s234 = sand.u32 %s30, 1
        %s235 = smul.addr %s234, 64
        %s236 = scalar_lea.vmem [#allocation2], %s235
        %p237 = pneg %p43
        %p238 = pneg %p40
        %s239 = smul.u32 2, %s22
        %p240 = scmp.lt.s32.totalorder %s239, 7
        %s241 = scalar_select %p240, %s239, 7
        %s242 = smul.addr %s241, 8
        %s243 = scalar_lea.vmem %s1, %s242
        %p244 = pneg %p69
        %p245 = pneg %p66
        %p246 = pneg %p90
        %p247 = pneg %p87
        %p248 = pneg %p111
        %p249 = pneg %p108
        %p250 = pneg %p132
        %p251 = pneg %p129
        %p252 = pneg %p158
        %p253 = pneg %p155
        %s254 = sand.u32 %s145, 1
        %s255 = scalar_lea.sflag [#allocation4], %s254
        %s256 = sand.u32 %s145, 1
        %s257 = smul.addr %s256, 64
        %s258 = scalar_lea.vmem [#allocation5], %s257
        %s259 = smul.u32 2, %s22
        %s260 = smul.u32 2, %s22
        %p261 = scmp.lt.s32.totalorder %s260, 7
        %s262 = scalar_select %p261, %s260, 7
        %s263 = smul.addr %s262, 8
        %s264 = scalar_lea.vmem %s1, %s263
        %s265 = smul.u32 2, %s22
        %s266 = smul.u32 2, %s22
        %v267 = vld [vmem:[%s264] sm:$0xff]
        %v268 = vld [vmem:[%s264 + $0x8] sm:$0xff]
        %v269 = vld [vmem:[%s3] sm:$0xff]
        %v270 = vld [vmem:[%s3 + $0x8] sm:$0xff]
        %v271 = vld [vmem:[%s3 + $0x10] sm:$0xff]
        %v272 = vld [vmem:[%s3 + $0x18] sm:$0xff]
        %v273 = vld [vmem:[%s3 + $0x20] sm:$0xff]
        %v274 = vld [vmem:[%s3 + $0x28] sm:$0xff]
        %v275 = vld [vmem:[%s3 + $0x30] sm:$0xff]
        %v276 = vld [vmem:[%s3 + $0x38] sm:$0xff]
        %v277 = vld [vmem:[%s3 + $0x40] sm:$0xff]
        %v278 = vld [vmem:[%s3 + $0x48] sm:$0xff]
        %v279 = vld [vmem:[%s3 + $0x50] sm:$0xff]
        %v280 = vld [vmem:[%s3 + $0x58] sm:$0xff]
        %v281 = vld [vmem:[%s4] sm:$0xff]
        %v282 = vld [vmem:[%s4 + $0x8] sm:$0xff]
        %v283 = vld [vmem:[%s4 + $0x10] sm:$0xff]
        %v284 = vld [vmem:[%s4 + $0x18] sm:$0xff]
        %v285 = vld [vmem:[%s4 + $0x20] sm:$0xff]
        %v286 = vld [vmem:[%s4 + $0x28] sm:$0xff]
        %v287 = vld [vmem:[%s4 + $0x30] sm:$0xff]
        %v288 = vld [vmem:[%s4 + $0x38] sm:$0xff]
        %v289 = vld [vmem:[%s4 + $0x40] sm:$0xff]
        %v290 = vld [vmem:[%s4 + $0x48] sm:$0xff]
        %v291 = vld [vmem:[%s4 + $0x50] sm:$0xff]
        %v292 = vld [vmem:[%s4 + $0x58] sm:$0xff]
        %294 = vset.pattern.permute.xlu0 0
        %295 = vperm.xlu0 %294, %v281
        %v296 = vpop.permute.xlu0 %295
        %299 = vset.pattern.permute.xlu0 0
        %300 = vperm.xlu0 %299, %v282
        %v301 = vpop.permute.xlu0 %300
        %304 = vset.pattern.permute.xlu0 0
        %305 = vperm.xlu0 %304, %v283
        %v306 = vpop.permute.xlu0 %305
        %309 = vset.pattern.permute.xlu0 0
        %310 = vperm.xlu0 %309, %v284
        %v311 = vpop.permute.xlu0 %310
        %314 = vset.pattern.permute.xlu0 0
        %315 = vperm.xlu0 %314, %v285
        %v316 = vpop.permute.xlu0 %315
        %319 = vset.pattern.permute.xlu0 0
        %320 = vperm.xlu0 %319, %v286
        %v321 = vpop.permute.xlu0 %320
        %324 = vset.pattern.permute.xlu0 0
        %325 = vperm.xlu0 %324, %v287
        %v326 = vpop.permute.xlu0 %325
        %329 = vset.pattern.permute.xlu0 0
        %330 = vperm.xlu0 %329, %v288
        %v331 = vpop.permute.xlu0 %330
        %334 = vset.pattern.permute.xlu0 0
        %335 = vperm.xlu0 %334, %v289
        %v336 = vpop.permute.xlu0 %335
        %339 = vset.pattern.permute.xlu0 0
        %340 = vperm.xlu0 %339, %v290
        %v341 = vpop.permute.xlu0 %340
        %344 = vset.pattern.permute.xlu0 0
        %345 = vperm.xlu0 %344, %v291
        %v346 = vpop.permute.xlu0 %345
        %349 = vset.pattern.permute.xlu0 0
        %350 = vperm.xlu0 %349, %v292
        %v351 = vpop.permute.xlu0 %350
        %vm353 = vcmask 64512
        %v355 = vsel %vm353, %v269, 0
        %v358 = vsel %vm353, %v270, 0
        %v361 = vsel %vm353, %v271, 0
        %v364 = vsel %vm353, %v272, 0
        %v367 = vsel %vm353, %v273, 0
        %v370 = vsel %vm353, %v274, 0
        %v373 = vsel %vm353, %v275, 0
        %v376 = vsel %vm353, %v276, 0
        %v379 = vsel %vm353, %v277, 0
        %v382 = vsel %vm353, %v278, 0
        %v385 = vsel %vm353, %v279, 0
        %v388 = vsel %vm353, %v280, 0
        %390 = vmatprep.subr.mxu0 0.0
        %391 = vmatpush1.msra.mxu0 0.0
        %392 = vmatprep.subr.mxu0 0.0
        %393 = vmatpush1.msra.mxu0 0.0
        %394 = vmatprep.subr.mxu0 0.0
        %395 = vmatpush1.msra.mxu0 0.0
        %396 = vmatprep.subr.mxu0 0.0
        %397 = vmatpush1.msra.mxu0 0.0
        %398 = vmatprep.subr.mxu0 0.0
        %399 = vmatpush1.msra.mxu0 0.0
        %400 = vmatprep.subr.mxu0 0.0
        %401 = vmatpush1.msra.mxu0 0.0
        %402 = vmatprep.subr.mxu0 0.0
        %403 = vmatpush1.msra.mxu0 0.0
        %404 = vmatprep.subr.mxu0 0.0
        %405 = vmatpush1.msra.mxu0 0.0
        %406 = vmatprep.subr.mxu0 0.0
        %407 = vmatpush1.msra.mxu0 0.0
        %408 = vmatprep.subr.mxu0 0.0
        %409 = vmatpush1.msra.mxu0 0.0
        %410 = vmatprep.subr.mxu0 0.0
        %411 = vmatpush1.msra.mxu0 0.0
        %412 = vmatprep.subr.mxu0 0.0
        %413 = vmatpush1.msra.mxu0 0.0
        %414 = vmatprep.subr.mxu0 0.0
        %415 = vmatpush1.msra.mxu0 0.0
        %416 = vmatprep.subr.mxu0 0.0
        %417 = vmatpush1.msra.mxu0 0.0
        %418 = vmatprep.subr.mxu0 0.0
        %419 = vmatpush1.msra.mxu0 0.0
        %420 = vmatprep.subr.mxu0 %v268
        %421 = vmatpush1.msra.mxu0 %v267
        %422 = vmatprep.subr.mxu0 0.0
        %423 = vmatpush2.msra.mxu0 0.0
        %424 = vmatprep.subr.mxu0 0.0
        %425 = vmatpush2.msra.mxu0 0.0
        %426 = vmatprep.subr.mxu0 0.0
        %427 = vmatpush2.msra.mxu0 0.0
        %428 = vmatprep.subr.mxu0 0.0
        %429 = vmatpush2.msra.mxu0 0.0
        %430 = vmatprep.subr.mxu0 0.0
        %431 = vmatpush2.msra.mxu0 0.0
        %432 = vmatprep.subr.mxu0 0.0
        %433 = vmatpush2.msra.mxu0 0.0
        %434 = vmatprep.subr.mxu0 0.0
        %435 = vmatpush2.msra.mxu0 0.0
        %436 = vmatprep.subr.mxu0 0.0
        %437 = vmatpush2.msra.mxu0 0.0
        %438 = vmatprep.subr.mxu0 0.0
        %439 = vmatpush2.msra.mxu0 0.0
        %440 = vmatprep.subr.mxu0 0.0
        %441 = vmatpush2.msra.mxu0 0.0
        %442 = vmatprep.subr.mxu0 0.0
        %443 = vmatpush2.msra.mxu0 0.0
        %444 = vmatprep.subr.mxu0 0.0
        %445 = vmatpush2.msra.mxu0 0.0
        %446 = vmatprep.subr.mxu0 0.0
        %447 = vmatpush2.msra.mxu0 0.0
        %448 = vmatprep.subr.mxu0 0.0
        %449 = vmatpush2.msra.mxu0 0.0
        %450 = vmatprep.subr.mxu0 0.0
        %451 = vmatpush2.msra.mxu0 0.0
        %452 = vmatprep.subr.mxu0 0.0
        %453 = vmatpush2.msra.mxu0 0.0
        %454 = vmatprep.mubr.f32.mxu0 0.0
        %455 = vmatmul.mubr.f32.gmra.mxu0 %v355
        %v456 = vpop.f32.mrf.mxu0
        %v457 = vadd.f32 %v296, %v456
        %v458 = vpop.f32.mrf.mxu0
        %v459 = vadd.f32 %v296, %v458
        %460 = vmatprep.mubr.f32.mxu0 0.0
        %461 = vmatmul.mubr.f32.gmra.mxu0 %v358
        %v462 = vpop.f32.mrf.mxu0
        %v463 = vadd.f32 %v301, %v462
        %v464 = vpop.f32.mrf.mxu0
        %v465 = vadd.f32 %v301, %v464
        %466 = vmatprep.mubr.f32.mxu0 0.0
        %467 = vmatmul.mubr.f32.gmra.mxu0 %v361
        %v468 = vpop.f32.mrf.mxu0
        %v469 = vadd.f32 %v306, %v468
        %v470 = vpop.f32.mrf.mxu0
        %v471 = vadd.f32 %v306, %v470
        %472 = vmatprep.mubr.f32.mxu0 0.0
        %473 = vmatmul.mubr.f32.gmra.mxu0 %v364
        %v474 = vpop.f32.mrf.mxu0
        %v475 = vadd.f32 %v311, %v474
        %v476 = vpop.f32.mrf.mxu0
        %v477 = vadd.f32 %v311, %v476
        %478 = vmatprep.mubr.f32.mxu0 0.0
        %479 = vmatmul.mubr.f32.gmra.mxu0 %v367
        %v480 = vpop.f32.mrf.mxu0
        %v481 = vadd.f32 %v316, %v480
        %v482 = vpop.f32.mrf.mxu0
        %v483 = vadd.f32 %v316, %v482
        %484 = vmatprep.mubr.f32.mxu0 0.0
        %485 = vmatmul.mubr.f32.gmra.mxu0 %v370
        %v486 = vpop.f32.mrf.mxu0
        %v487 = vadd.f32 %v321, %v486
        %v488 = vpop.f32.mrf.mxu0
        %v489 = vadd.f32 %v321, %v488
        %490 = vmatprep.mubr.f32.mxu0 0.0
        %491 = vmatmul.mubr.f32.gmra.mxu0 %v373
        %v492 = vpop.f32.mrf.mxu0
        %v493 = vadd.f32 %v326, %v492
        %v494 = vpop.f32.mrf.mxu0
        %v495 = vadd.f32 %v326, %v494
        %496 = vmatprep.mubr.f32.mxu0 0.0
        %497 = vmatmul.mubr.f32.gmra.mxu0 %v376
        %v498 = vpop.f32.mrf.mxu0
        %v499 = vadd.f32 %v331, %v498
        %v500 = vpop.f32.mrf.mxu0
        %v501 = vadd.f32 %v331, %v500
        %502 = vmatprep.mubr.f32.mxu0 0.0
        %503 = vmatmul.mubr.f32.gmra.mxu0 %v379
        %v504 = vpop.f32.mrf.mxu0
        %v505 = vadd.f32 %v336, %v504
        %v506 = vpop.f32.mrf.mxu0
        %v507 = vadd.f32 %v336, %v506
        %508 = vmatprep.mubr.f32.mxu0 0.0
        %509 = vmatmul.mubr.f32.gmra.mxu0 %v382
        %v510 = vpop.f32.mrf.mxu0
        %v511 = vadd.f32 %v341, %v510
        %v512 = vpop.f32.mrf.mxu0
        %v513 = vadd.f32 %v341, %v512
        %514 = vmatprep.mubr.f32.mxu0 0.0
        %515 = vmatmul.mubr.f32.gmra.mxu0 %v385
        %v516 = vpop.f32.mrf.mxu0
        %v517 = vadd.f32 %v346, %v516
        %v518 = vpop.f32.mrf.mxu0
        %v519 = vadd.f32 %v346, %v518
        %520 = vmatprep.mubr.f32.mxu0 0.0
        %521 = vmatmul.mubr.f32.gmra.mxu0 %v388
        %v522 = vpop.f32.mrf.mxu0
        %v523 = vadd.f32 %v351, %v522
        %v524 = vpop.f32.mrf.mxu0
        %v525 = vadd.f32 %v351, %v524
        %526 = vdwg.mxu0
        %v527 = vld [vmem:[%s227] sm:$0xff]
        %v528 = vld [vmem:[%s227 + $0x8] sm:$0xff]
        %v529 = vld [vmem:[%s227 + $0x10] sm:$0xff]
        %v530 = vld [vmem:[%s227 + $0x18] sm:$0xff]
        %v531 = vld [vmem:[%s227 + $0x20] sm:$0xff]
        %v532 = vld [vmem:[%s227 + $0x28] sm:$0xff]
        %v533 = vld [vmem:[%s227 + $0x30] sm:$0xff]
        %v534 = vld [vmem:[%s227 + $0x38] sm:$0xff]
        %v535 = vld [vmem:[%s2] sm:$0xff]
        %v536 = vld [vmem:[%s2 + $0x8] sm:$0xff]
        %v537 = vld [vmem:[%s2 + $0x10] sm:$0xff]
        %v538 = vld [vmem:[%s2 + $0x18] sm:$0xff]
        %vm539 = vcmask 261120
        %v541 = vsel %vm539, %v535, 0
        %v544 = vsel %vm539, %v536, 0
        %v547 = vsel %vm539, %v537, 0
        %v550 = vsel %vm539, %v538, 0
        %552 = vmatprep.subr.mxu0 0.0
        %553 = vmatpush1.msra.mxu0 0.0
        %554 = vmatprep.subr.mxu0 0.0
        %555 = vmatpush1.msra.mxu0 0.0
        %556 = vmatprep.subr.mxu0 0.0
        %557 = vmatpush1.msra.mxu0 0.0
        %558 = vmatprep.subr.mxu0 0.0
        %559 = vmatpush1.msra.mxu0 0.0
        %560 = vmatprep.subr.mxu0 0.0
        %561 = vmatpush1.msra.mxu0 0.0
        %562 = vmatprep.subr.mxu0 0.0
        %563 = vmatpush1.msra.mxu0 0.0
        %564 = vmatprep.subr.mxu0 0.0
        %565 = vmatpush1.msra.mxu0 0.0
        %566 = vmatprep.subr.mxu0 0.0
        %567 = vmatpush1.msra.mxu0 0.0
        %568 = vmatprep.subr.mxu0 0.0
        %569 = vmatpush1.msra.mxu0 0.0
        %570 = vmatprep.subr.mxu0 0.0
        %571 = vmatpush1.msra.mxu0 0.0
        %572 = vmatprep.subr.mxu0 0.0
        %573 = vmatpush1.msra.mxu0 0.0
        %574 = vmatprep.subr.mxu0 0.0
        %575 = vmatpush1.msra.mxu0 0.0
        %576 = vmatprep.subr.mxu0 %v534
        %577 = vmatpush1.msra.mxu0 %v533
        %578 = vmatprep.subr.mxu0 %v532
        %579 = vmatpush1.msra.mxu0 %v531
        %580 = vmatprep.subr.mxu0 %v530
        %581 = vmatpush1.msra.mxu0 %v529
        %582 = vmatprep.subr.mxu0 %v528
        %583 = vmatpush1.msra.mxu0 %v527
        %584 = vmatprep.subr.mxu0 0.0
        %585 = vmatpush2.msra.mxu0 0.0
        %586 = vmatprep.subr.mxu0 0.0
        %587 = vmatpush2.msra.mxu0 0.0
        %588 = vmatprep.subr.mxu0 0.0
        %589 = vmatpush2.msra.mxu0 0.0
        %590 = vmatprep.subr.mxu0 0.0
        %591 = vmatpush2.msra.mxu0 0.0
        %592 = vmatprep.subr.mxu0 0.0
        %593 = vmatpush2.msra.mxu0 0.0
        %594 = vmatprep.subr.mxu0 0.0
        %595 = vmatpush2.msra.mxu0 0.0
        %596 = vmatprep.subr.mxu0 0.0
        %597 = vmatpush2.msra.mxu0 0.0
        %598 = vmatprep.subr.mxu0 0.0
        %599 = vmatpush2.msra.mxu0 0.0
        %600 = vmatprep.subr.mxu0 0.0
        %601 = vmatpush2.msra.mxu0 0.0
        %602 = vmatprep.subr.mxu0 0.0
        %603 = vmatpush2.msra.mxu0 0.0
        %604 = vmatprep.subr.mxu0 0.0
        %605 = vmatpush2.msra.mxu0 0.0
        %606 = vmatprep.subr.mxu0 0.0
        %607 = vmatpush2.msra.mxu0 0.0
        %608 = vmatprep.subr.mxu0 0.0
        %609 = vmatpush2.msra.mxu0 0.0
        %610 = vmatprep.subr.mxu0 0.0
        %611 = vmatpush2.msra.mxu0 0.0
        %612 = vmatprep.subr.mxu0 0.0
        %613 = vmatpush2.msra.mxu0 0.0
        %614 = vmatprep.subr.mxu0 0.0
        %615 = vmatpush2.msra.mxu0 0.0
        %616 = vmatprep.mubr.f32.mxu0 0.0
        %617 = vmatmul.mubr.f32.gmra.mxu0 %v541
        %v618 = vpop.f32.mrf.mxu0
        %v619 = vadd.f32 %v457, %v618
        %v620 = vpop.f32.mrf.mxu0
        %v621 = vadd.f32 %v459, %v620
        %622 = vmatprep.mubr.f32.mxu0 0.0
        %623 = vmatmul.mubr.f32.gmra.mxu0 %v544
        %v624 = vpop.f32.mrf.mxu0
        %v625 = vadd.f32 %v463, %v624
        %v626 = vpop.f32.mrf.mxu0
        %v627 = vadd.f32 %v465, %v626
        %628 = vmatprep.mubr.f32.mxu0 0.0
        %629 = vmatmul.mubr.f32.gmra.mxu0 %v547
        %v630 = vpop.f32.mrf.mxu0
        %v631 = vadd.f32 %v469, %v630
        %v632 = vpop.f32.mrf.mxu0
        %v633 = vadd.f32 %v471, %v632
        %634 = vmatprep.mubr.f32.mxu0 0.0
        %635 = vmatmul.mubr.f32.gmra.mxu0 %v550
        %v636 = vpop.f32.mrf.mxu0
        %v637 = vadd.f32 %v475, %v636
        %v638 = vpop.f32.mrf.mxu0
        %v639 = vadd.f32 %v477, %v638
        %640 = vdwg.mxu0
        %v641 = vmax.f32 %v619, 0.0
        %v642 = vmax.f32 %v621, 0.0
        %v643 = vmax.f32 %v625, 0.0
        %v644 = vmax.f32 %v627, 0.0
        %v645 = vmax.f32 %v631, 0.0
        %v646 = vmax.f32 %v633, 0.0
        %v647 = vmax.f32 %v637, 0.0
        %v648 = vmax.f32 %v639, 0.0
        %s649 = scalar_lea.vmem %s2, 32
        %v650 = vld [vmem:[%s649] sm:$0xff]
        %v651 = vld [vmem:[%s649 + $0x8] sm:$0xff]
        %v652 = vld [vmem:[%s649 + $0x10] sm:$0xff]
        %v653 = vld [vmem:[%s649 + $0x18] sm:$0xff]
        %v655 = vsel %vm539, %v650, 0
        %v658 = vsel %vm539, %v651, 0
        %v661 = vsel %vm539, %v652, 0
        %v664 = vsel %vm539, %v653, 0
        %666 = vmatprep.subr.mxu0 0.0
        %667 = vmatpush1.msra.mxu0 0.0
        %668 = vmatprep.subr.mxu0 0.0
        %669 = vmatpush1.msra.mxu0 0.0
        %670 = vmatprep.subr.mxu0 0.0
        %671 = vmatpush1.msra.mxu0 0.0
        %672 = vmatprep.subr.mxu0 0.0
        %673 = vmatpush1.msra.mxu0 0.0
        %674 = vmatprep.subr.mxu0 0.0
        %675 = vmatpush1.msra.mxu0 0.0
        %676 = vmatprep.subr.mxu0 0.0
        %677 = vmatpush1.msra.mxu0 0.0
        %678 = vmatprep.subr.mxu0 0.0
        %679 = vmatpush1.msra.mxu0 0.0
        %680 = vmatprep.subr.mxu0 0.0
        %681 = vmatpush1.msra.mxu0 0.0
        %682 = vmatprep.subr.mxu0 0.0
        %683 = vmatpush1.msra.mxu0 0.0
        %684 = vmatprep.subr.mxu0 0.0
        %685 = vmatpush1.msra.mxu0 0.0
        %686 = vmatprep.subr.mxu0 0.0
        %687 = vmatpush1.msra.mxu0 0.0
        %688 = vmatprep.subr.mxu0 0.0
        %689 = vmatpush1.msra.mxu0 0.0
        %690 = vmatprep.subr.mxu0 %v648
        %691 = vmatpush1.msra.mxu0 %v647
        %692 = vmatprep.subr.mxu0 %v646
        %693 = vmatpush1.msra.mxu0 %v645
        %694 = vmatprep.subr.mxu0 %v644
        %695 = vmatpush1.msra.mxu0 %v643
        %696 = vmatprep.subr.mxu0 %v642
        %697 = vmatpush1.msra.mxu0 %v641
        %698 = vmatprep.subr.mxu0 0.0
        %699 = vmatpush2.msra.mxu0 0.0
        %700 = vmatprep.subr.mxu0 0.0
        %701 = vmatpush2.msra.mxu0 0.0
        %702 = vmatprep.subr.mxu0 0.0
        %703 = vmatpush2.msra.mxu0 0.0
        %704 = vmatprep.subr.mxu0 0.0
        %705 = vmatpush2.msra.mxu0 0.0
        %706 = vmatprep.subr.mxu0 0.0
        %707 = vmatpush2.msra.mxu0 0.0
        %708 = vmatprep.subr.mxu0 0.0
        %709 = vmatpush2.msra.mxu0 0.0
        %710 = vmatprep.subr.mxu0 0.0
        %711 = vmatpush2.msra.mxu0 0.0
        %712 = vmatprep.subr.mxu0 0.0
        %713 = vmatpush2.msra.mxu0 0.0
        %714 = vmatprep.subr.mxu0 0.0
        %715 = vmatpush2.msra.mxu0 0.0
        %716 = vmatprep.subr.mxu0 0.0
        %717 = vmatpush2.msra.mxu0 0.0
        %718 = vmatprep.subr.mxu0 0.0
        %719 = vmatpush2.msra.mxu0 0.0
        %720 = vmatprep.subr.mxu0 0.0
        %721 = vmatpush2.msra.mxu0 0.0
        %722 = vmatprep.subr.mxu0 0.0
        %723 = vmatpush2.msra.mxu0 0.0
        %724 = vmatprep.subr.mxu0 0.0
        %725 = vmatpush2.msra.mxu0 0.0
        %726 = vmatprep.subr.mxu0 0.0
        %727 = vmatpush2.msra.mxu0 0.0
        %728 = vmatprep.subr.mxu0 0.0
        %729 = vmatpush2.msra.mxu0 0.0
        %730 = vmatprep.mubr.f32.mxu0 0.0
        %731 = vmatmul.mubr.f32.gmra.mxu0 %v655
        %v732 = vpop.f32.mrf.mxu0
        %v733 = vadd.f32 %v481, %v732
        %v734 = vpop.f32.mrf.mxu0
        %v735 = vadd.f32 %v483, %v734
        %736 = vmatprep.mubr.f32.mxu0 0.0
        %737 = vmatmul.mubr.f32.gmra.mxu0 %v658
        %v738 = vpop.f32.mrf.mxu0
        %v739 = vadd.f32 %v487, %v738
        %v740 = vpop.f32.mrf.mxu0
        %v741 = vadd.f32 %v489, %v740
        %742 = vmatprep.mubr.f32.mxu0 0.0
        %743 = vmatmul.mubr.f32.gmra.mxu0 %v661
        %v744 = vpop.f32.mrf.mxu0
        %v745 = vadd.f32 %v493, %v744
        %v746 = vpop.f32.mrf.mxu0
        %v747 = vadd.f32 %v495, %v746
        %748 = vmatprep.mubr.f32.mxu0 0.0
        %749 = vmatmul.mubr.f32.gmra.mxu0 %v664
        %v750 = vpop.f32.mrf.mxu0
        %v751 = vadd.f32 %v499, %v750
        %v752 = vpop.f32.mrf.mxu0
        %v753 = vadd.f32 %v501, %v752
        %754 = vdwg.mxu0
        %v755 = vmax.f32 %v733, 0.0
        %v756 = vmax.f32 %v735, 0.0
        %v757 = vmax.f32 %v739, 0.0
        %v758 = vmax.f32 %v741, 0.0
        %v759 = vmax.f32 %v745, 0.0
        %v760 = vmax.f32 %v747, 0.0
        %v761 = vmax.f32 %v751, 0.0
        %v762 = vmax.f32 %v753, 0.0
        %s763 = scalar_lea.vmem %s2, 64
        %v764 = vld [vmem:[%s763] sm:$0xff]
        %v765 = vld [vmem:[%s763 + $0x8] sm:$0xff]
        %v766 = vld [vmem:[%s763 + $0x10] sm:$0xff]
        %v767 = vld [vmem:[%s763 + $0x18] sm:$0xff]
        %v769 = vsel %vm539, %v764, 0
        %v772 = vsel %vm539, %v765, 0
        %v775 = vsel %vm539, %v766, 0
        %v778 = vsel %vm539, %v767, 0
        %780 = vmatprep.subr.mxu0 0.0
        %781 = vmatpush1.msra.mxu0 0.0
        %782 = vmatprep.subr.mxu0 0.0
        %783 = vmatpush1.msra.mxu0 0.0
        %784 = vmatprep.subr.mxu0 0.0
        %785 = vmatpush1.msra.mxu0 0.0
        %786 = vmatprep.subr.mxu0 0.0
        %787 = vmatpush1.msra.mxu0 0.0
        %788 = vmatprep.subr.mxu0 0.0
        %789 = vmatpush1.msra.mxu0 0.0
        %790 = vmatprep.subr.mxu0 0.0
        %791 = vmatpush1.msra.mxu0 0.0
        %792 = vmatprep.subr.mxu0 0.0
        %793 = vmatpush1.msra.mxu0 0.0
        %794 = vmatprep.subr.mxu0 0.0
        %795 = vmatpush1.msra.mxu0 0.0
        %796 = vmatprep.subr.mxu0 0.0
        %797 = vmatpush1.msra.mxu0 0.0
        %798 = vmatprep.subr.mxu0 0.0
        %799 = vmatpush1.msra.mxu0 0.0
        %800 = vmatprep.subr.mxu0 0.0
        %801 = vmatpush1.msra.mxu0 0.0
        %802 = vmatprep.subr.mxu0 0.0
        %803 = vmatpush1.msra.mxu0 0.0
        %804 = vmatprep.subr.mxu0 %v762
        %805 = vmatpush1.msra.mxu0 %v761
        %806 = vmatprep.subr.mxu0 %v760
        %807 = vmatpush1.msra.mxu0 %v759
        %808 = vmatprep.subr.mxu0 %v758
        %809 = vmatpush1.msra.mxu0 %v757
        %810 = vmatprep.subr.mxu0 %v756
        %811 = vmatpush1.msra.mxu0 %v755
        %812 = vmatprep.subr.mxu0 0.0
        %813 = vmatpush2.msra.mxu0 0.0
        %814 = vmatprep.subr.mxu0 0.0
        %815 = vmatpush2.msra.mxu0 0.0
        %816 = vmatprep.subr.mxu0 0.0
        %817 = vmatpush2.msra.mxu0 0.0
        %818 = vmatprep.subr.mxu0 0.0
        %819 = vmatpush2.msra.mxu0 0.0
        %820 = vmatprep.subr.mxu0 0.0
        %821 = vmatpush2.msra.mxu0 0.0
        %822 = vmatprep.subr.mxu0 0.0
        %823 = vmatpush2.msra.mxu0 0.0
        %824 = vmatprep.subr.mxu0 0.0
        %825 = vmatpush2.msra.mxu0 0.0
        %826 = vmatprep.subr.mxu0 0.0
        %827 = vmatpush2.msra.mxu0 0.0
        %828 = vmatprep.subr.mxu0 0.0
        %829 = vmatpush2.msra.mxu0 0.0
        %830 = vmatprep.subr.mxu0 0.0
        %831 = vmatpush2.msra.mxu0 0.0
        %832 = vmatprep.subr.mxu0 0.0
        %833 = vmatpush2.msra.mxu0 0.0
        %834 = vmatprep.subr.mxu0 0.0
        %835 = vmatpush2.msra.mxu0 0.0
        %836 = vmatprep.subr.mxu0 0.0
        %837 = vmatpush2.msra.mxu0 0.0
        %838 = vmatprep.subr.mxu0 0.0
        %839 = vmatpush2.msra.mxu0 0.0
        %840 = vmatprep.subr.mxu0 0.0
        %841 = vmatpush2.msra.mxu0 0.0
        %842 = vmatprep.subr.mxu0 0.0
        %843 = vmatpush2.msra.mxu0 0.0
        %844 = vmatprep.mubr.f32.mxu0 0.0
        %845 = vmatmul.mubr.f32.gmra.mxu0 %v769
        %v846 = vpop.f32.mrf.mxu0
        %v847 = vadd.f32 %v505, %v846
        %v848 = vpop.f32.mrf.mxu0
        %v849 = vadd.f32 %v507, %v848
        %850 = vmatprep.mubr.f32.mxu0 0.0
        %851 = vmatmul.mubr.f32.gmra.mxu0 %v772
        %v852 = vpop.f32.mrf.mxu0
        %v853 = vadd.f32 %v511, %v852
        %v854 = vpop.f32.mrf.mxu0
        %v855 = vadd.f32 %v513, %v854
        %856 = vmatprep.mubr.f32.mxu0 0.0
        %857 = vmatmul.mubr.f32.gmra.mxu0 %v775
        %v858 = vpop.f32.mrf.mxu0
        %v859 = vadd.f32 %v517, %v858
        %v860 = vpop.f32.mrf.mxu0
        %v861 = vadd.f32 %v519, %v860
        %862 = vmatprep.mubr.f32.mxu0 0.0
        %863 = vmatmul.mubr.f32.gmra.mxu0 %v778
        %v864 = vpop.f32.mrf.mxu0
        %v865 = vadd.f32 %v523, %v864
        %v866 = vpop.f32.mrf.mxu0
        %v867 = vadd.f32 %v525, %v866
        %868 = vdwg.mxu0
        %v869 = vmax.f32 %v847, 0.0
        %v870 = vmax.f32 %v849, 0.0
        %v871 = vmax.f32 %v853, 0.0
        %v872 = vmax.f32 %v855, 0.0
        %v873 = vmax.f32 %v859, 0.0
        %v874 = vmax.f32 %v861, 0.0
        %v875 = vmax.f32 %v865, 0.0
        %v876 = vmax.f32 %v867, 0.0
        %877 = vst [vmem:[%s258] sm:$0xff] %v869
        %878 = vst [vmem:[%s258 + $0x8] sm:$0xff] %v870
        %879 = vst [vmem:[%s258 + $0x10] sm:$0xff] %v871
        %880 = vst [vmem:[%s258 + $0x18] sm:$0xff] %v872
        %881 = vst [vmem:[%s258 + $0x20] sm:$0xff] %v873
        %882 = vst [vmem:[%s258 + $0x28] sm:$0xff] %v874
        %883 = vst [vmem:[%s258 + $0x30] sm:$0xff] %v875
        %884 = vst [vmem:[%s258 + $0x38] sm:$0xff] %v876
        %s885 = sand.u32 %s145, 1
        %s886 = scalar_lea.sflag [#allocation4], %s885
        %s887 = sand.u32 %s145, 1
        %s888 = smul.addr %s887, 64
        %s889 = scalar_lea.vmem [#allocation5], %s888
        // Predicated region
        $region45: #{tpu_custom_call.1} parent=39 // pred_check
          %p890 = pneg %p155
        $region46: #{tpu_custom_call.1} parent=39 // pred_check_branch
          %892 = sbr.rel (%p890) target = $region48
        $region47: #{tpu_custom_call.1} parent=39 // pred_region
          %s893 = smul.u32 2, %s22
          %s895 = ssub.s32 1024, 1024
          %896 = vsyncadd %s886, %s895
          %s897 = smul.addr %s893, 128
          %s898 = scalar_lea.hbm %s5, %s897
          %s899 = sshll.u32 %s889, 4
          %s900 = int_to_ptr.vmem [resolvable:$true] %s899
          %905 = dma.vmem_to_hbm [thread:$0]  %s900, 1024, %s898, %s886, 256, 1024, 16
        $region48: #{tpu_custom_call.1} parent=39 // pred_fallthru
          _
      $region40: #{tpu_custom_call.1} parent=5 // pred_fallthru
        _
      %p906 = scmp.le.s32.totalorder 2, %s17
      // Predicated region
      $region49: #{tpu_custom_call.1} parent=5 // pred_check
        %p907 = pneg %p906
      $region50: #{tpu_custom_call.1} parent=5 // pred_check_branch
        %909 = sbr.rel (%p907) target = $region52
      $region51: #{tpu_custom_call.1} parent=5 // pred_region
        %s910 = ssub.s32 %s17, 2
        // Predicated region
        $region53: #{tpu_custom_call.1} parent=51 // pred_check
          %p911 = pneg %p161
        $region54: #{tpu_custom_call.1} parent=51 // pred_check_branch
          %913 = sbr.rel (%p911) target = $region56
        $region55: #{tpu_custom_call.1} parent=51 // pred_region
          %s914 = sand.u32 %s146, 1
          %s915 = scalar_lea.sflag [#allocation4], %s914
          %s916 = sand.u32 %s146, 1
          %s917 = smul.addr %s916, 64
          %s918 = scalar_lea.vmem [#allocation5], %s917
          %919 = dma.done %s915, 1024
        $region56: #{tpu_custom_call.1} parent=51 // pred_fallthru
          _
      $region52: #{tpu_custom_call.1} parent=5 // pred_fallthru
        _
    $region6: #{tpu_custom_call.1} parent=1 // loop_footer
      %s21 = sadd.s32 1, %s17
    $region7: #{tpu_custom_call.1} parent=1 // loop_footer_branch
      %16 = sbr.rel target = $region3
    $region8: #{tpu_custom_call.1} parent=1 // loop_exit
      _
    %920 = vsyncpa [#allocation3], 1
    %s921 = scalar_lea.sflag [#allocation3], 1
    %922 = vsyncpa %s921, 1
    %923 = vsyncpa [#allocation4], 1
    %s924 = scalar_lea.sflag [#allocation4], 1
    %925 = vsyncpa %s924, 1

</llo_original>
